<compile_context>
chip_gen: v7x
topology: tpu7x:2x2x1
jax: 0.10.0
libtpu: 0.0.40
codegen_flags: <defaults>
</compile_context>

<pallas_src>
import functools
import math

import jax
import jax.numpy as jnp
from jax.experimental import pallas as pl
from jax.experimental.pallas import tpu as pltpu


# ------------------------------ tiling helper ------------------------------

def _pick_tile_m(M, target=256):
    """Largest row tile <= target that divides M (multiple of 8 preferred).

    Falls back to a single full-extent block (always legal) if no clean
    divisor exists.  target=256 keeps double-buffered bf16 tiles well inside
    v7x's 64 MiB VMEM while still amortizing per-grid-step overhead.
    """
    if M <= target:
        return M
    for t in range(target - target % 8, 0, -8):
        if M % t == 0:
            return t
    return M


def _parallel_params():
    return pltpu.CompilerParams(dimension_semantics=("parallel",))


# ----------------------------- Pallas kernels ------------------------------

def _ln_kernel(x_ref, g_ref, b_ref, o_ref, *, eps):
    x = x_ref[...].astype(jnp.float32)
    mean = jnp.mean(x, axis=-1, keepdims=True)
    xc = x - mean
    var = jnp.mean(xc * xc, axis=-1, keepdims=True)
    y = xc * jax.lax.rsqrt(var + eps) * g_ref[...] + b_ref[...]
    o_ref[...] = y.astype(o_ref.dtype)


def _dense_bias_kernel(x_ref, w_ref, b_ref, o_ref):
    # bf16 x bf16 -> f32 accumulate on the MXU, bias add in f32.
    y = jnp.dot(x_ref[...], w_ref[...],
                preferred_element_type=jnp.float32) + b_ref[...]
    o_ref[...] = y.astype(o_ref.dtype)


def _dense_res_ln_kernel(x_ref, w_ref, b_ref, r_ref, g_ref, bb_ref, o_ref,
                         *, eps):
    # y = LayerNorm(x @ w + b + residual) * g + bb   (fused epilogue)
    y = jnp.dot(x_ref[...], w_ref[...],
                preferred_element_type=jnp.float32) + b_ref[...]
    y = y + r_ref[...].astype(jnp.float32)
    mean = jnp.mean(y, axis=-1, keepdims=True)
    yc = y - mean
    var = jnp.mean(yc * yc, axis=-1, keepdims=True)
    out = yc * jax.lax.rsqrt(var + eps) * g_ref[...] + bb_ref[...]
    o_ref[...] = out.astype(o_ref.dtype)


def _gelu_f32(y):
    # TODO(synk): HF BERT default hidden_act is exact (erf) GELU; the tanh
    # approximation is used for a clean Mosaic lowering (tiny numeric delta).
    c = 0.7978845608028654  # sqrt(2/pi)
    return 0.5 * y * (1.0 + jnp.tanh(c * (y + 0.044715 * y * y * y)))


def _ffn_ln_kernel(x_ref, w1_ref, b1_ref, w2_ref, b2_ref, g_ref, bb_ref,
                   o_ref, *, eps):
    # Fused FFN: LayerNorm(GELU(x @ w1 + b1) @ w2 + b2 + x) * g + bb.
    # The (tile_m, I) intermediate never leaves VMEM.
    x = x_ref[...]                                          # bf16 (tile_m, H)
    h1 = jnp.dot(x, w1_ref[...],
                 preferred_element_type=jnp.float32) + b1_ref[...]
    g1 = _gelu_f32(h1)
    h2 = jnp.dot(g1.astype(x.dtype), w2_ref[...],
                 preferred_element_type=jnp.float32) + b2_ref[...]
    y = h2 + x.astype(jnp.float32)
    mean = jnp.mean(y, axis=-1, keepdims=True)
    yc = y - mean
    var = jnp.mean(yc * yc, axis=-1, keepdims=True)
    out = yc * jax.lax.rsqrt(var + eps) * g_ref[...] + bb_ref[...]
    o_ref[...] = out.astype(o_ref.dtype)


def _attn_kernel(qkv_ref, bias_ref, o_ref, *, n_heads, head_dim, scale):
    # All heads for one batch element; per-head slices are static lane slices.
    # TODO(synk): for long sequences (S >= 512) tile the query axis and use an
    # online-softmax accumulator instead of materializing full (S, S) scores.
    qkv = qkv_ref[0]                     # (S, 3H) bf16
    bias = bias_ref[0]                   # (1, S)  f32 additive mask (0/-10000)
    H = n_heads * head_dim
    ctxs = []
    for h in range(n_heads):
        lo = h * head_dim
        q = qkv[:, lo:lo + head_dim]                       # (S, Dh) bf16
        k = qkv[:, H + lo:H + lo + head_dim]               # (S, Dh) bf16
        v = qkv[:, 2 * H + lo:2 * H + lo + head_dim]       # (S, Dh) bf16
        scores = jax.lax.dot_general(
            q, k, (((1,), (1,)), ((), ())),
            preferred_element_type=jnp.float32) * scale + bias      # (S, S) f32
        m = jnp.max(scores, axis=-1, keepdims=True)
        e = jnp.exp(scores - m)
        denom = jnp.sum(e, axis=-1, keepdims=True)
        p = e * pl.reciprocal(denom, approx=True)
        ctxs.append(jnp.dot(p.astype(v.dtype), v,
                            preferred_element_type=jnp.float32))    # (S, Dh)
    # single lane-dense (S, H) store
    o_ref[0] = jnp.concatenate(ctxs, axis=-1).astype(o_ref.dtype)


def _pool_kernel(h_ref, m_ref, o_ref):
    h = h_ref[0].astype(jnp.float32)                     # (S, H)
    m = m_ref[0]                                         # (S, 1) float mask
    s = jnp.sum(h * m, axis=0, keepdims=True)            # (1, H)
    lens = jnp.maximum(jnp.sum(m, axis=0, keepdims=True), 1.0)   # (1, 1)
    o_ref[0] = s * pl.reciprocal(lens, approx=True)


# ----------------------------- kernel wrappers ------------------------------

def layernorm(x, gamma, beta, eps=1e-12, out_dtype=jnp.bfloat16):
    M, H = x.shape
    tm = _pick_tile_m(M)
    kernel = functools.partial(_ln_kernel, eps=eps)
    return pl.pallas_call(
        kernel,
        out_shape=jax.ShapeDtypeStruct((M, H), out_dtype),
        grid=(M // tm,),
        in_specs=[
            pl.BlockSpec((tm, H), lambda i: (i, 0)),
            pl.BlockSpec((1, H), lambda i: (0, 0)),
            pl.BlockSpec((1, H), lambda i: (0, 0)),
        ],
        out_specs=pl.BlockSpec((tm, H), lambda i: (i, 0)),
        compiler_params=_parallel_params(),
    )(x, gamma.reshape(1, H), beta.reshape(1, H))


def dense_bias(x, w, b, out_dtype=jnp.bfloat16):
    M, K = x.shape
    N = w.shape[1]
    tm = _pick_tile_m(M)
    return pl.pallas_call(
        _dense_bias_kernel,
        out_shape=jax.ShapeDtypeStruct((M, N), out_dtype),
        grid=(M // tm,),
        in_specs=[
            pl.BlockSpec((tm, K), lambda i: (i, 0)),
            pl.BlockSpec((K, N), lambda i: (0, 0)),
            pl.BlockSpec((1, N), lambda i: (0, 0)),
        ],
        out_specs=pl.BlockSpec((tm, N), lambda i: (i, 0)),
        compiler_params=_parallel_params(),
    )(x, w, b.reshape(1, N))


def dense_res_ln(x, w, b, res, gamma, beta, eps=1e-12, out_dtype=jnp.bfloat16):
    M, K = x.shape
    N = w.shape[1]
    tm = _pick_tile_m(M)
    kernel = functools.partial(_dense_res_ln_kernel, eps=eps)
    return pl.pallas_call(
        kernel,
        out_shape=jax.ShapeDtypeStruct((M, N), out_dtype),
        grid=(M // tm,),
        in_specs=[
            pl.BlockSpec((tm, K), lambda i: (i, 0)),
            pl.BlockSpec((K, N), lambda i: (0, 0)),
            pl.BlockSpec((1, N), lambda i: (0, 0)),
            pl.BlockSpec((tm, N), lambda i: (i, 0)),
            pl.BlockSpec((1, N), lambda i: (0, 0)),
            pl.BlockSpec((1, N), lambda i: (0, 0)),
        ],
        out_specs=pl.BlockSpec((tm, N), lambda i: (i, 0)),
        compiler_params=_parallel_params(),
    )(x, w, b.reshape(1, N), res, gamma.reshape(1, N), beta.reshape(1, N))


def ffn_ln(x, w1, b1, w2, b2, gamma, beta, eps=1e-12, out_dtype=jnp.bfloat16):
    M, H = x.shape
    I = w1.shape[1]
    tm = _pick_tile_m(M)
    kernel = functools.partial(_ffn_ln_kernel, eps=eps)
    return pl.pallas_call(
        kernel,
        out_shape=jax.ShapeDtypeStruct((M, H), out_dtype),
        grid=(M // tm,),
        in_specs=[
            pl.BlockSpec((tm, H), lambda i: (i, 0)),
            pl.BlockSpec((H, I), lambda i: (0, 0)),
            pl.BlockSpec((1, I), lambda i: (0, 0)),
            pl.BlockSpec((I, H), lambda i: (0, 0)),
            pl.BlockSpec((1, H), lambda i: (0, 0)),
            pl.BlockSpec((1, H), lambda i: (0, 0)),
            pl.BlockSpec((1, H), lambda i: (0, 0)),
        ],
        out_specs=pl.BlockSpec((tm, H), lambda i: (i, 0)),
        compiler_params=_parallel_params(),
    )(x, w1, b1.reshape(1, I), w2, b2.reshape(1, H),
      gamma.reshape(1, H), beta.reshape(1, H))


def attention(qkv, bias, n_heads, head_dim, scale, out_dtype=jnp.bfloat16):
    """qkv: (B, S, 3H) bf16; bias: (B, 1, S) f32. Returns (B, S, H) bf16."""
    B, S, threeH = qkv.shape
    H = n_heads * head_dim
    kernel = functools.partial(_attn_kernel, n_heads=n_heads,
                               head_dim=head_dim, scale=scale)
    return pl.pallas_call(
        kernel,
        out_shape=jax.ShapeDtypeStruct((B, S, H), out_dtype),
        grid=(B,),
        in_specs=[
            pl.BlockSpec((1, S, threeH), lambda b: (b, 0, 0)),
            pl.BlockSpec((1, 1, S), lambda b: (b, 0, 0)),
        ],
        out_specs=pl.BlockSpec((1, S, H), lambda b: (b, 0, 0)),
        compiler_params=_parallel_params(),
    )(qkv, bias)


def masked_mean(hidden, mask_f):
    """hidden: (B, S, H) bf16, mask_f: (B, S) float. Returns (B, H) f32."""
    B, S, H = hidden.shape
    out = pl.pallas_call(
        _pool_kernel,
        out_shape=jax.ShapeDtypeStruct((B, 1, H), jnp.float32),
        grid=(B,),
        in_specs=[
            pl.BlockSpec((1, S, H), lambda b: (b, 0, 0)),
            pl.BlockSpec((1, S, 1), lambda b: (b, 0, 0)),
        ],
        out_specs=pl.BlockSpec((1, 1, H), lambda b: (b, 0, 0)),
        compiler_params=_parallel_params(),
    )(hidden, mask_f.reshape(B, S, 1))
    return out.reshape(B, H)


# ------------------------- parameters & forward ---------------------------

def init_params(key, vocab, hidden, n_layers, intermediate, max_pos):
    std = 0.02  # BERT initializer_range
    wdt = jnp.bfloat16   # weight matrices in bf16 (MXU-native, half HBM traffic)
    keys = jax.random.split(key, 3 + n_layers)
    params = dict(
        word_emb=std * jax.random.normal(keys[0], (vocab, hidden), jnp.float32),
        pos_emb=std * jax.random.normal(keys[1], (max_pos, hidden), jnp.float32),
        type_emb=std * jax.random.normal(keys[2], (2, hidden), jnp.float32),
        emb_ln_g=jnp.ones((hidden,), jnp.float32),
        emb_ln_b=jnp.zeros((hidden,), jnp.float32),
        layers=[],
    )
    for l in range(n_layers):
        lk = jax.random.split(keys[3 + l], 6)
        wq = std * jax.random.normal(lk[0], (hidden, hidden), jnp.float32)
        wk = std * jax.random.normal(lk[1], (hidden, hidden), jnp.float32)
        wv = std * jax.random.normal(lk[2], (hidden, hidden), jnp.float32)
        params['layers'].append(dict(
            # fused QKV projection weight/bias
            wqkv=jnp.concatenate([wq, wk, wv], axis=1).astype(wdt),   # (H, 3H)
            bqkv=jnp.zeros((3 * hidden,), jnp.float32),
            wo=(std * jax.random.normal(lk[3], (hidden, hidden),
                                        jnp.float32)).astype(wdt),
            bo=jnp.zeros((hidden,), jnp.float32),
            ln1_g=jnp.ones((hidden,), jnp.float32),
            ln1_b=jnp.zeros((hidden,), jnp.float32),
            w1=(std * jax.random.normal(lk[4], (hidden, intermediate),
                                        jnp.float32)).astype(wdt),
            b1=jnp.zeros((intermediate,), jnp.float32),
            w2=(std * jax.random.normal(lk[5], (intermediate, hidden),
                                        jnp.float32)).astype(wdt),
            b2=jnp.zeros((hidden,), jnp.float32),
            ln2_g=jnp.ones((hidden,), jnp.float32),
            ln2_b=jnp.zeros((hidden,), jnp.float32),
        ))
    return params


def bert_encoder_forward(ids, params, n_heads, pad_index=0):
    B, S = ids.shape
    H = params['word_emb'].shape[1]
    Dh = H // n_heads
    scale = 1.0 / math.sqrt(Dh)
    M = B * S

    # bert_mask = ids.ne(pad_index)
    mask_f = (ids != pad_index).astype(jnp.float32)              # (B, S)
    attn_bias = ((1.0 - mask_f) * -10000.0).reshape(B, 1, S)     # HF extended mask, f32

    # Embeddings: table gathers are glue (plain JAX); LayerNorm in Pallas.
    word_e = params['word_emb'][ids]                             # (B, S, H)
    pos_e = params['pos_emb'][:S][None, :, :]                    # (1, S, H)
    type_e = params['type_emb'][0][None, None, :]                # (1, 1, H)
    emb = (word_e + pos_e + type_e).reshape(M, H)
    x = layernorm(emb, params['emb_ln_g'], params['emb_ln_b'])   # bf16 (M, H)

    for layer in params['layers']:
        # fused QKV projection -> (M, 3H) bf16
        qkv = dense_bias(x, layer['wqkv'], layer['bqkv'])
        # attention stays in (B, S, H) layout, no head transposes
        ctx = attention(qkv.reshape(B, S, 3 * H), attn_bias, n_heads, Dh, scale)
        # out-proj + bias + residual + LayerNorm fused
        x = dense_res_ln(ctx.reshape(M, H), layer['wo'], layer['bo'], x,
                         layer['ln1_g'], layer['ln1_b'])
        # GELU(w1) -> w2 -> residual -> LayerNorm fused (intermediate stays in VMEM)
        x = ffn_ln(x, layer['w1'], layer['b1'], layer['w2'], layer['b2'],
                   layer['ln2_g'], layer['ln2_b'])

    # last_hidden[~mask] = 0 ; sum(1) / lens  -> masked mean pooling kernel
    hidden = x.reshape(B, S, H)
    return masked_mean(hidden, mask_f)                           # (B, H) f32


# --------------------------------- main ------------------------------------

if __name__ == "__main__":
    B, S = 2, 8                 # batch, sequence length
    H, n_heads = 32, 4          # hidden size, attention heads
    I, L = 64, 2                # intermediate size, num hidden layers
    vocab, max_pos = 50, 64
    pad_index = 0

    key = jax.random.PRNGKey(0)
    pkey, ikey = jax.random.split(key)
    params = init_params(pkey, vocab, H, L, I, max_pos)

    ids = jax.random.randint(ikey, (B, S), 1, vocab, dtype=jnp.int32)
    ids = ids.at[0, 6:].set(pad_index).at[1, 5:].set(pad_index)  # trailing pads

    out = bert_encoder_forward(ids, params, n_heads, pad_index=pad_index)
    out = jax.block_until_ready(out)
    assert out.shape == (B, H) and out.dtype == jnp.float32
    assert bool(jnp.all(jnp.isfinite(out)))
    print("KERNEL_OK")
</pallas_src>

<mosaic_0001>
module attributes {stable_mosaic.version = 11 : i64} {
  func.func @_ln_kernel(%arg0: i32, %arg1: memref<16x32xf32, #tpu.memory_space<vmem>>, %arg2: memref<1x32xf32, #tpu.memory_space<vmem>>, %arg3: memref<1x32xf32, #tpu.memory_space<vmem>>, %arg4: memref<16x32xbf16, #tpu.memory_space<vmem>>) attributes {dimension_semantics = [#tpu.dimension_semantics<parallel>], iteration_bounds = array<i64: 1>, scalar_prefetch = 0 : i64, scratch_operands = 0 : i64, tpu.core_type = #tpu.core_type<tc>, window_params = [{transform_indices = @transform_0, window_bounds = array<i64: 16, 32>}, {pipeline_mode = #tpu.pipeline_mode<synchronous>, transform_indices = @transform_1, window_bounds = array<i64: 1, 32>}, {pipeline_mode = #tpu.pipeline_mode<synchronous>, transform_indices = @transform_2, window_bounds = array<i64: 1, 32>}, {transform_indices = @transform_3, window_bounds = array<i64: 16, 32>}]} {
    %c0 = arith.constant 0 : index
    %c0_0 = arith.constant 0 : index
    %0 = vector.load %arg1[%c0, %c0_0] : memref<16x32xf32, #tpu.memory_space<vmem>>, vector<16x32xf32>
    %cst = arith.constant dense<0.000000e+00> : vector<16xf32>
    %1 = vector.multi_reduction <add>, %0, %cst [1] : vector<16x32xf32> to vector<16xf32>
    %2 = vector.shape_cast %1 : vector<16xf32> to vector<16x1xf32>
    %cst_1 = arith.constant 3.200000e+01 : f32
    %3 = vector.broadcast %cst_1 : f32 to vector<16x1xf32>
    %4 = arith.divf %2, %3 : vector<16x1xf32>
    %5 = vector.broadcast %4 : vector<16x1xf32> to vector<16x32xf32>
    %6 = arith.subf %0, %5 : vector<16x32xf32>
    %7 = arith.mulf %6, %6 : vector<16x32xf32>
    %cst_2 = arith.constant dense<0.000000e+00> : vector<16xf32>
    %8 = vector.multi_reduction <add>, %7, %cst_2 [1] : vector<16x32xf32> to vector<16xf32>
    %9 = vector.shape_cast %8 : vector<16xf32> to vector<16x1xf32>
    %cst_3 = arith.constant 3.200000e+01 : f32
    %10 = vector.broadcast %cst_3 : f32 to vector<16x1xf32>
    %11 = arith.divf %9, %10 : vector<16x1xf32>
    %cst_4 = arith.constant 9.99999996E-13 : f32
    %12 = vector.broadcast %cst_4 : f32 to vector<16x1xf32>
    %13 = arith.addf %11, %12 : vector<16x1xf32>
    %14 = math.rsqrt %13 : vector<16x1xf32>
    %15 = vector.broadcast %14 : vector<16x1xf32> to vector<16x32xf32>
    %16 = arith.mulf %6, %15 : vector<16x32xf32>
    %c0_5 = arith.constant 0 : index
    %c0_6 = arith.constant 0 : index
    %17 = vector.load %arg2[%c0_5, %c0_6] : memref<1x32xf32, #tpu.memory_space<vmem>>, vector<1x32xf32>
    %18 = vector.broadcast %17 : vector<1x32xf32> to vector<16x32xf32>
    %19 = arith.mulf %16, %18 : vector<16x32xf32>
    %c0_7 = arith.constant 0 : index
    %c0_8 = arith.constant 0 : index
    %20 = vector.load %arg3[%c0_7, %c0_8] : memref<1x32xf32, #tpu.memory_space<vmem>>, vector<1x32xf32>
    %21 = vector.broadcast %20 : vector<1x32xf32> to vector<16x32xf32>
    %22 = arith.addf %19, %21 : vector<16x32xf32>
    %23 = arith.truncf %22 : vector<16x32xf32> to vector<16x32xbf16>
    %c0_9 = arith.constant 0 : index
    %c0_10 = arith.constant 0 : index
    %24 = vector.load %arg4[%c0_9, %c0_10] : memref<16x32xbf16, #tpu.memory_space<vmem>>, vector<16x32xbf16>
    tpu.vector_store %arg4[%c0_9, %c0_10], %23 {strides = array<i32>} : memref<16x32xbf16, #tpu.memory_space<vmem>>, vector<16x32xbf16>,
    return
  }
  func.func @transform_0(%arg0: i32) -> (i32, i32) {
    %c0_i32 = arith.constant 0 : i32
    %c0_i32_0 = arith.constant 0 : i32
    return %arg0, %c0_i32 : i32, i32
  }
  func.func @transform_1(%arg0: i32) -> (i32, i32) {
    %c0_i32 = arith.constant 0 : i32
    %c0_i32_0 = arith.constant 0 : i32
    %c0_i32_1 = arith.constant 0 : i32
    return %c0_i32, %c0_i32_0 : i32, i32
  }
  func.func @transform_2(%arg0: i32) -> (i32, i32) {
    %c0_i32 = arith.constant 0 : i32
    %c0_i32_0 = arith.constant 0 : i32
    %c0_i32_1 = arith.constant 0 : i32
    return %c0_i32, %c0_i32_0 : i32, i32
  }
  func.func @transform_3(%arg0: i32) -> (i32, i32) {
    %c0_i32 = arith.constant 0 : i32
    %c0_i32_0 = arith.constant 0 : i32
    return %arg0, %c0_i32 : i32, i32
  }
}

</mosaic_0001>

<llo_original>
// kernel: tpu_custom_call.1
$region0: #{tpu_custom_call.1}
  #allocation0 [shape = 'u32[]', space=smem, size = 0x4, offset = 0x4, fixed_abs, tag = 'smem constant byte address 0x4 - core index']
  #allocation1 [shape = 'u32[144,128]{1,0:T(1,128)}', space=vmem, size = 0x12000, scoped, tag = 'internal scratch']
  %s0 = inlined_call_operand.hbm [shape: f32[16,32], index: 0, kind: input, shape index: {}]
  %s1 = inlined_call_operand.vmem [shape: f32[1,32], index: 1, kind: input, shape index: {}]
  %s2 = inlined_call_operand.vmem [shape: f32[1,32], index: 2, kind: input, shape index: {}]
  %s3 = inlined_call_operand.hbm [shape: bf16[16,32], index: 3, kind: output, shape index: {}]
  %s4 = sld [smem:[#allocation0]]
  $region26: #{tpu_custom_call.1} parent=0
    _
  %s6 = ssub.s32 1, %s4
  %s7 = scalar_select 0, %s6, %s4
  $region1: #{tpu_custom_call.1} parent=0
    #allocation2 [shape = 'u8[8192]{0}', space=vmem, size = 0x2000, scoped, tag = 'input window, operand 0, single buffered']
    #allocation3 [shape = 's32[1]{0}', space=sflag, size = 0x4, scoped, tag = 'scoped memory for tpu_custom_call.1']
    #allocation4 [shape = 's32[1]{0}', space=sflag, size = 0x4, scoped, tag = 'scoped memory for tpu_custom_call.1']
    #allocation5 [shape = 'u8[4096]{0}', space=vmem, size = 0x1000, scoped, tag = 'output window, operand 0, single buffered']
    %8 = vsyncpa [#allocation3], 0
    %9 = vsyncpa [#allocation4], 0
    // Predicated region
    $region2: #{tpu_custom_call.1} parent=1 // pred_check
      _
    $region3: #{tpu_custom_call.1} parent=1 // pred_check_branch
      %11 = sbr.rel (0) target = $region5
    $region4: #{tpu_custom_call.1} parent=1 // pred_region
      %s13 = ssub.s32 256, 256
      %14 = vsyncadd [#allocation3], %s13
      %s15 = sshll.u32 [#allocation2], 4
      %s16 = int_to_ptr.vmem [resolvable:$true] %s15
      %21 = dma.hbm_to_vmem [thread:$0]  %s0, 256, %s16, [#allocation3], 128, 128, 8
    $region5: #{tpu_custom_call.1} parent=1 // pred_fallthru
      _
    // Predicated region
    $region6: #{tpu_custom_call.1} parent=1 // pred_check
      _
    $region7: #{tpu_custom_call.1} parent=1 // pred_check_branch
      %23 = sbr.rel (0) target = $region9
    $region8: #{tpu_custom_call.1} parent=1 // pred_region
      _
    $region9: #{tpu_custom_call.1} parent=1 // pred_fallthru
      _
    // Predicated region
    $region10: #{tpu_custom_call.1} parent=1 // pred_check
      _
    $region11: #{tpu_custom_call.1} parent=1 // pred_check_branch
      %25 = sbr.rel (0) target = $region13
    $region12: #{tpu_custom_call.1} parent=1 // pred_region
      _
    $region13: #{tpu_custom_call.1} parent=1 // pred_fallthru
      _
    // Predicated region
    $region14: #{tpu_custom_call.1} parent=1 // pred_check
      _
    $region15: #{tpu_custom_call.1} parent=1 // pred_check_branch
      %27 = sbr.rel (0) target = $region17
    $region16: #{tpu_custom_call.1} parent=1 // pred_region
      %28 = dma.done [#allocation3], 256
    $region17: #{tpu_custom_call.1} parent=1 // pred_fallthru
      _
    %v29 = vld [vmem:[#allocation2] sm:$0xff]
    %v30 = vld [vmem:[#allocation2 + $0x8] sm:$0xff]
    %vm31 = vcmask 261120
    %v32 = vsel %vm31, %v29, 0.0
    %33 = vadd.xlane.f32.xlu0 %v32
    %v34 = vpop.xlane.xlu0 %33
    %v35 = vsel %vm31, %v30, 0.0
    %36 = vadd.xlane.f32.xlu0 %v35
    %v37 = vpop.xlane.xlu0 %36
    %v38 = vrcp.pop 32.0
    %v39 = vmul.f32 %v34, %v38
    %v40 = vmul.f32 %v37, %v38
    %v41 = vsub.f32 %v29, %v39
    %v42 = vsub.f32 %v30, %v40
    %v43 = vmul.f32 %v41, %v41
    %v44 = vmul.f32 %v42, %v42
    %v45 = vsel %vm31, %v43, 0.0
    %46 = vadd.xlane.f32.xlu0 %v45
    %v47 = vpop.xlane.xlu0 %46
    %v48 = vsel %vm31, %v44, 0.0
    %49 = vadd.xlane.f32.xlu0 %v48
    %v50 = vpop.xlane.xlu0 %49
    %v51 = vmul.f32 %v47, %v38
    %v52 = vmul.f32 %v50, %v38
    %v53 = vadd.f32 %v51, 1e-12
    %v54 = vadd.f32 %v52, 1e-12
    %v55 = vrsqrt.pop %v53
    %v56 = vrsqrt.pop %v54
    %v57 = vmul.f32 %v41, %v55
    %v58 = vmul.f32 %v42, %v56
    %v59 = vld [vmem:[%s1] sm:$0x1]
    %v61 = vlaneseq
    %v62 = vshrl.u32 %v61, 7
    %v63 = vsub.s32 0, %v62
    %v64 = vrot.slane %v59, %v63
    %v66 = vmul.f32 %v57, %v64
    %v67 = vmul.f32 %v58, %v64
    %v68 = vld [vmem:[%s2] sm:$0x1]
    %v70 = vlaneseq
    %v71 = vshrl.u32 %v70, 7
    %v72 = vsub.s32 0, %v71
    %v73 = vrot.slane %v68, %v72
    %v75 = vadd.f32 %v66, %v73
    %v76 = vadd.f32 %v67, %v73
    %v77 = vpack.c.bf16 %v76, %v75
    %v79 = vunpack.c.l.b16 %v77
    %v80 = vunpack.c.h.b16 %v77
    %v81 = vpack.c.b16 %v79, %v79
    %v82 = vpack.c.b16 %v80, %v80
    %vm85 = vcmask 257024
    %86 = vst.msk [vmem:[#allocation5] sm:$0xf] %vm85, %v81
    %87 = vst.msk [vmem:[#allocation5 + $0x4] sm:$0xf] %vm85, %v82
    // Predicated region
    $region18: #{tpu_custom_call.1} parent=1 // pred_check
      _
    $region19: #{tpu_custom_call.1} parent=1 // pred_check_branch
      %89 = sbr.rel (0) target = $region21
    $region20: #{tpu_custom_call.1} parent=1 // pred_region
      %s91 = ssub.s32 128, 128
      %92 = vsyncadd [#allocation4], %s91
      %s93 = sshll.u32 [#allocation5], 4
      %s94 = int_to_ptr.vmem [resolvable:$true] %s93
      %99 = dma.vmem_to_hbm [thread:$0]  %s94, 128, %s3, [#allocation4], 64, 64, 4
    $region21: #{tpu_custom_call.1} parent=1 // pred_fallthru
      _
    // Predicated region
    $region22: #{tpu_custom_call.1} parent=1 // pred_check
      _
    $region23: #{tpu_custom_call.1} parent=1 // pred_check_branch
      %101 = sbr.rel (0) target = $region25
    $region24: #{tpu_custom_call.1} parent=1 // pred_region
      %102 = dma.done [#allocation4], 128
    $region25: #{tpu_custom_call.1} parent=1 // pred_fallthru
      _
    %103 = vsyncpa [#allocation3], 1
    %104 = vsyncpa [#allocation4], 1

</llo_original>
